<compile_context>
chip_gen: v7x
topology: tpu7x:2x2x1
jax: 0.10.0
libtpu: 0.0.40
codegen_flags: <defaults>
</compile_context>

<pallas_src>
import jax
import jax.numpy as jnp
from jax import lax
from jax.experimental import pallas as pl
from jax.experimental.pallas import tpu as pltpu

LANE = 128
SUBLANE = 8


def _round_up(x, m):
    return ((x + m - 1) // m) * m


# --------------------------------------------------------------------------
# Kernel: TB batch elements per grid step.  Feature dims are pre-padded to
# multiples of 128; padded weight/bias entries are zero, so padded columns stay
# exactly zero through ReLU / pooling / normalize and are sliced off outside.
# --------------------------------------------------------------------------
def general_encoder_kernel(
    hs_ref,            # (TB*S, H)   f32   hidden states for TB examples
    mask_ref,          # (TB, S)     f32   attention mask pre-scaled by 1/count
    w1_ref, b1_ref,    # (H,   D1p) bf16, (1, D1p) f32   pre-pooling layer 1
    w2_ref, b2_ref,    # (D1p, D2p) bf16, (1, D2p) f32   pre-pooling layer 2
    w3_ref, b3_ref,    # (D2p, D3p) bf16, (1, D3p) f32   post-pooling layer 1
    w4_ref, b4_ref,    # (D3p, D4p) bf16, (1, D4p) f32   post-pooling layer 2
    out_ref,           # (TB, D4p)   f32
):
    tb, s = mask_ref.shape

    # ---- pre_pooling_net: (Linear -> ReLU -> Dropout[eval=id]) x 2, M=TB*S ---
    x = hs_ref[...].astype(jnp.bfloat16)                               # cast in VMEM
    h = jnp.dot(x, w1_ref[...], preferred_element_type=jnp.float32) + b1_ref[...]
    h = jnp.maximum(h, 0.0)                                            # f32 VPU
    h = jnp.dot(h.astype(jnp.bfloat16), w2_ref[...],
                preferred_element_type=jnp.float32) + b2_ref[...]
    h = jnp.maximum(h, 0.0)                                            # (TB*S, D2p) f32

    # ---- compute_average_with_padding: VPU masked multiply + sublane sum -----
    d2p = h.shape[-1]
    h3 = h.reshape(tb, s, d2p)                                         # tile-aligned
    w = mask_ref[...][:, :, None]                                      # (TB, S, 1) = mask/count
    pooled = jnp.sum(h3 * w, axis=1)                                   # (TB, D2p) f32

    # ---- post_pooling_net: Linear -> ReLU -> Dropout[eval=id] -> Linear ------
    y = jnp.dot(pooled.astype(jnp.bfloat16), w3_ref[...],
                preferred_element_type=jnp.float32) + b3_ref[...]
    y = jnp.maximum(y, 0.0)
    y = jnp.dot(y.astype(jnp.bfloat16), w4_ref[...],
                preferred_element_type=jnp.float32) + b4_ref[...]      # (TB, D4p) f32

    # ---- F.normalize: y / max(||y||_2, 1e-12) via EUP rsqrt ------------------
    sumsq = jnp.sum(y * y, axis=-1, keepdims=True)
    y = y * lax.rsqrt(jnp.maximum(sumsq, 1e-24))                       # eps^2 = 1e-24

    out_ref[...] = y.astype(out_ref.dtype)


# --------------------------------------------------------------------------
# One-time preparation (hoisted out of the per-forward path).
# --------------------------------------------------------------------------
def prepare_params(params, hidden_size):
    """Pad fan-out dims to multiples of 128, cast weights to bf16.  Call ONCE."""
    def pad_linear(w, b, in_pad, out_pad):
        ki, ko = w.shape
        wp = jnp.pad(w, ((0, in_pad - ki), (0, out_pad - ko)))
        bp = jnp.pad(b.reshape(1, -1), ((0, 0), (0, out_pad - ko)))
        return wp.astype(jnp.bfloat16), bp.astype(jnp.float32)

    (w1, b1), (w2, b2), (w3, b3), (w4, b4) = params
    D1, D2, D3, D4 = w1.shape[1], w2.shape[1], w3.shape[1], w4.shape[1]
    D1p, D2p, D3p, D4p = (_round_up(d, LANE) for d in (D1, D2, D3, D4))
    # K of the first matmul (hidden_size) is left at the full hs extent so hs
    # itself needs no wrapper-side pad pass (no extra HBM traffic on the
    # dominant memory stream).
    padded = (
        pad_linear(w1, b1, hidden_size, D1p),
        pad_linear(w2, b2, D1p, D2p),
        pad_linear(w3, b3, D2p, D3p),
        pad_linear(w4, b4, D3p, D4p),
    )
    return padded, D4


def prepare_mask(attention_mask):
    """mask / count with an exact f32 divide.  Counts clamped at 1 so fully
    padded rows give 0 instead of NaN (differs from the PyTorch reference)."""
    m = attention_mask.astype(jnp.float32)
    count = jnp.maximum(jnp.sum(m, axis=-1, keepdims=True), 1.0)
    return m / count


# --------------------------------------------------------------------------
# Batch-tile selection: big MXU M per step, VMEM-safe on v7x, sublane-legal.
# --------------------------------------------------------------------------
def _choose_tb(B, S, H, D1p, D2p):
    tb = max(1, 512 // max(S, 1))                  # aim for >=512 MXU rows/step
    # VMEM budget: double-buffered hs block + f32 activation working set kept
    # under ~24 MiB so the kernel is safe on v7x (64 MiB/TC) as well as v5e/v6e.
    per_example = S * 4 * (2 * H + D1p + D2p)
    tb = max(1, min(tb, (24 * 1024 * 1024) // max(per_example, 1)))
    if tb >= B:
        tb = B
        # v7x has 2 TensorCores: keep >=2 grid steps when each half still feeds
        # the MXU with >=256 rows and satisfies sublane tiling.
        half = B // 2
        if half % SUBLANE == 0 and half * S >= 256:
            tb = half
    else:
        # grid > 1: TB must be a sublane multiple for the (TB, S)/(TB, D4p) blocks.
        tb = max(SUBLANE, (tb // SUBLANE) * SUBLANE)
    return tb


# --------------------------------------------------------------------------
# Forward wrapper: builds the batch-tiled grid; weights are VMEM-resident.
# --------------------------------------------------------------------------
def general_encoder_forward(hs, mask_scaled, padded_params, out_dim):
    """hs: (B, S, H) f32; mask_scaled: (B, S) f32 (= attention_mask / count)."""
    B, S, H = hs.shape
    (w1p, b1p), (w2p, b2p), (w3p, b3p), (w4p, b4p) = padded_params
    D1p, D2p, D3p, D4p = (w.shape[1] for w in (w1p, w2p, w3p, w4p))

    tb = _choose_tb(B, S, H, D1p, D2p)
    Bp = _round_up(B, tb)
    if Bp != B:
        hs = jnp.pad(hs, ((0, Bp - B), (0, 0), (0, 0)))
        mask_scaled = jnp.pad(mask_scaled, ((0, Bp - B), (0, 0)))
    grid = Bp // tb

    hs2d = hs.reshape(Bp * S, H)                    # contiguous -> free reshape

    resident = lambda shape: pl.BlockSpec(shape, lambda i: (0, 0))   # VMEM-resident
    in_specs = [
        # NOTE: if DMA is still exposed at large B, add pipeline_mode=pl.Buffered(3)
        # on this spec rather than shrinking the block.
        pl.BlockSpec((tb * S, H), lambda i: (i, 0)),  # hs rows for this step
        pl.BlockSpec((tb, S), lambda i: (i, 0)),      # scaled mask rows
        resident(w1p.shape), resident(b1p.shape),
        resident(w2p.shape), resident(b2p.shape),
        resident(w3p.shape), resident(b3p.shape),
        resident(w4p.shape), resident(b4p.shape),
    ]
    out_spec = pl.BlockSpec((tb, D4p), lambda i: (i, 0))

    flops = (
        2 * Bp * S * (H * D1p + D1p * D2p)      # pre-pooling matmuls
        + 2 * Bp * S * D2p                      # pooling masked sum
        + 2 * Bp * (D2p * D3p + D3p * D4p)      # post-pooling matmuls
    )
    weight_bytes = sum(int(a.size) * a.dtype.itemsize
                       for a in (w1p, b1p, w2p, b2p, w3p, b3p, w4p, b4p))
    bytes_accessed = int(hs2d.size * 4 + mask_scaled.size * 4
                         + weight_bytes + Bp * D4p * 4)
    cost = pl.CostEstimate(flops=int(flops), transcendentals=int(Bp),
                           bytes_accessed=bytes_accessed)

    # VMEM: double-buffered I/O blocks + resident weights + activation slab.
    block_bytes = (2 * (tb * S * H * 4 + tb * S * 4 + tb * D4p * 4)
                   + weight_bytes + tb * S * (D1p + D2p) * 4)
    vmem_limit = int(min(48 * 1024 * 1024, max(32 * 1024 * 1024, 2 * block_bytes)))

    out_padded = pl.pallas_call(
        general_encoder_kernel,
        out_shape=jax.ShapeDtypeStruct((Bp, D4p), jnp.float32),
        grid=(grid,),
        in_specs=in_specs,
        out_specs=out_spec,
        compiler_params=pltpu.CompilerParams(
            dimension_semantics=("parallel",),   # megacore-shard batch steps (v7x)
            vmem_limit_bytes=vmem_limit,
        ),
        cost_estimate=cost,
    )(hs2d, mask_scaled, w1p, b1p, w2p, b2p, w3p, b3p, w4p, b4p)

    return out_padded[:B, :out_dim]


# --------------------------------------------------------------------------
# Pure-JAX f32 reference (matches the PyTorch forward in eval mode).
# --------------------------------------------------------------------------
def reference_forward(hs, attention_mask, params):
    (w1, b1), (w2, b2), (w3, b3), (w4, b4) = params
    x = jnp.maximum(hs @ w1 + b1, 0.0)
    x = jnp.maximum(x @ w2 + b2, 0.0)
    mask = attention_mask[:, :, None]
    pooled = jnp.sum(x * mask, axis=1) / jnp.sum(attention_mask, axis=1, keepdims=True)
    y = jnp.maximum(pooled @ w3 + b3, 0.0)
    y = y @ w4 + b4
    norm = jnp.sqrt(jnp.sum(y * y, axis=-1, keepdims=True))
    return y / jnp.maximum(norm, 1e-12)


# --------------------------------------------------------------------------
# Deterministic parameter init (PyTorch nn.Linear default: U(-1/sqrt(fan_in), .)).
# Weights stored pre-transposed as (fan_in, fan_out) so the kernel does x @ W.
# --------------------------------------------------------------------------
def init_linear(key, fan_in, fan_out):
    kw, kb = jax.random.split(key)
    bound = 1.0 / jnp.sqrt(jnp.float32(fan_in))
    w = jax.random.uniform(kw, (fan_in, fan_out), jnp.float32, -bound, bound)
    b = jax.random.uniform(kb, (1, fan_out), jnp.float32, -bound, bound)
    return w, b


if __name__ == "__main__":
    # Hyper-params (synthetic): pooling_type='avg', normalize_model_result=True,
    # layers_pre_pooling=[64, 32], layers_post_pooling=[32, 16], dropout=0.1 (eval).
    B, S, H = 2, 8, 32
    layers_pre = [64, 32]
    layers_post = [32, 16]

    key = jax.random.PRNGKey(0)
    k_hs, k_l1, k_l2, k_l3, k_l4 = jax.random.split(key, 5)

    hs = jax.random.normal(k_hs, (B, S, H), jnp.float32)

    # attention mask with some padding (second example has 6 valid tokens)
    attention_mask = jnp.ones((B, S), jnp.float32)
    attention_mask = attention_mask.at[1, 6:].set(0.0)

    params = (
        init_linear(k_l1, H, layers_pre[0]),               # pre layer 1
        init_linear(k_l2, layers_pre[0], layers_pre[1]),   # pre layer 2
        init_linear(k_l3, layers_pre[1], layers_post[0]),  # post layer 1
        init_linear(k_l4, layers_post[0], layers_post[1]), # post layer 2 (no ReLU)
    )

    # One-time prep: padded bf16 weights (hoisted out of the per-call path).
    padded_params, out_dim = prepare_params(params, H)
    mask_scaled = prepare_mask(attention_mask)

    forward = jax.jit(general_encoder_forward, static_argnums=(3,))
    out = forward(hs, mask_scaled, padded_params, out_dim)
    out = jax.block_until_ready(out)

    assert out.shape == (B, layers_post[-1])
    assert bool(jnp.all(jnp.isfinite(out)))

    # L2-normalized rows should have unit norm
    norms = jnp.sqrt(jnp.sum(out * out, axis=-1))
    assert bool(jnp.all(jnp.abs(norms - 1.0) < 1e-3))

    # match the f32 reference (loose tolerance: bf16 MXU operands)
    ref = reference_forward(hs, attention_mask, params)
    assert bool(jnp.max(jnp.abs(out - ref)) < 5e-2)

    print("KERNEL_OK")
</pallas_src>

<mosaic_0001>
module attributes {stable_mosaic.version = 11 : i64} {
  func.func @general_encoder_kernel(%arg0: i32, %arg1: memref<16x32xf32, #tpu.memory_space<vmem>>, %arg2: memref<2x8xf32, #tpu.memory_space<vmem>>, %arg3: memref<32x128xbf16, #tpu.memory_space<vmem>>, %arg4: memref<1x128xf32, #tpu.memory_space<vmem>>, %arg5: memref<128x128xbf16, #tpu.memory_space<vmem>>, %arg6: memref<1x128xf32, #tpu.memory_space<vmem>>, %arg7: memref<128x128xbf16, #tpu.memory_space<vmem>>, %arg8: memref<1x128xf32, #tpu.memory_space<vmem>>, %arg9: memref<128x128xbf16, #tpu.memory_space<vmem>>, %arg10: memref<1x128xf32, #tpu.memory_space<vmem>>, %arg11: memref<2x128xf32, #tpu.memory_space<vmem>>) attributes {dimension_semantics = [#tpu.dimension_semantics<parallel>], iteration_bounds = array<i64: 1>, scalar_prefetch = 0 : i64, scratch_operands = 0 : i64, tpu.core_type = #tpu.core_type<tc>, window_params = [{transform_indices = @transform_0, window_bounds = array<i64: 16, 32>}, {transform_indices = @transform_1, window_bounds = array<i64: 2, 8>}, {pipeline_mode = #tpu.pipeline_mode<synchronous>, transform_indices = @transform_2, window_bounds = array<i64: 32, 128>}, {pipeline_mode = #tpu.pipeline_mode<synchronous>, transform_indices = @transform_3, window_bounds = array<i64: 1, 128>}, {pipeline_mode = #tpu.pipeline_mode<synchronous>, transform_indices = @transform_4, window_bounds = array<i64: 128, 128>}, {pipeline_mode = #tpu.pipeline_mode<synchronous>, transform_indices = @transform_5, window_bounds = array<i64: 1, 128>}, {pipeline_mode = #tpu.pipeline_mode<synchronous>, transform_indices = @transform_6, window_bounds = array<i64: 128, 128>}, {pipeline_mode = #tpu.pipeline_mode<synchronous>, transform_indices = @transform_7, window_bounds = array<i64: 1, 128>}, {pipeline_mode = #tpu.pipeline_mode<synchronous>, transform_indices = @transform_8, window_bounds = array<i64: 128, 128>}, {pipeline_mode = #tpu.pipeline_mode<synchronous>, transform_indices = @transform_9, window_bounds = array<i64: 1, 128>}, {transform_indices = @transform_10, window_bounds = array<i64: 2, 128>}]} {
    %c0 = arith.constant 0 : index
    %c0_0 = arith.constant 0 : index
    %0 = vector.load %arg1[%c0, %c0_0] : memref<16x32xf32, #tpu.memory_space<vmem>>, vector<16x32xf32>
    %1 = arith.truncf %0 : vector<16x32xf32> to vector<16x32xbf16>
    %c0_1 = arith.constant 0 : index
    %c0_2 = arith.constant 0 : index
    %2 = vector.load %arg3[%c0_1, %c0_2] : memref<32x128xbf16, #tpu.memory_space<vmem>>, vector<32x128xbf16>
    %cst = arith.constant dense<0.000000e+00> : vector<16x128xf32>
    %3 = tpu.matmul %1, %2, %cst {dimension_numbers = #tpu.dot_dimension_numbers<[1], [0], [0], [1], [0, 0, 1, 1], [], []>} : vector<16x32xbf16>, vector<32x128xbf16>, vector<16x128xf32> -> vector<16x128xf32>
    %c0_3 = arith.constant 0 : index
    %c0_4 = arith.constant 0 : index
    %4 = vector.load %arg4[%c0_3, %c0_4] : memref<1x128xf32, #tpu.memory_space<vmem>>, vector<1x128xf32>
    %5 = vector.broadcast %4 : vector<1x128xf32> to vector<16x128xf32>
    %6 = arith.addf %3, %5 : vector<16x128xf32>
    %cst_5 = arith.constant 0.000000e+00 : f32
    %7 = vector.broadcast %cst_5 : f32 to vector<16x128xf32>
    %8 = arith.maximumf %6, %7 : vector<16x128xf32>
    %9 = arith.truncf %8 : vector<16x128xf32> to vector<16x128xbf16>
    %c0_6 = arith.constant 0 : index
    %c0_7 = arith.constant 0 : index
    %10 = vector.load %arg5[%c0_6, %c0_7] : memref<128x128xbf16, #tpu.memory_space<vmem>>, vector<128x128xbf16>
    %cst_8 = arith.constant dense<0.000000e+00> : vector<16x128xf32>
    %11 = tpu.matmul %9, %10, %cst_8 {dimension_numbers = #tpu.dot_dimension_numbers<[1], [0], [0], [1], [0, 0, 1, 1], [], []>} : vector<16x128xbf16>, vector<128x128xbf16>, vector<16x128xf32> -> vector<16x128xf32>
    %c0_9 = arith.constant 0 : index
    %c0_10 = arith.constant 0 : index
    %12 = vector.load %arg6[%c0_9, %c0_10] : memref<1x128xf32, #tpu.memory_space<vmem>>, vector<1x128xf32>
    %13 = vector.broadcast %12 : vector<1x128xf32> to vector<16x128xf32>
    %14 = arith.addf %11, %13 : vector<16x128xf32>
    %cst_11 = arith.constant 0.000000e+00 : f32
    %15 = vector.broadcast %cst_11 : f32 to vector<16x128xf32>
    %16 = arith.maximumf %14, %15 : vector<16x128xf32>
    %17 = vector.shape_cast %16 : vector<16x128xf32> to vector<2x8x128xf32>
    %c0_12 = arith.constant 0 : index
    %c0_13 = arith.constant 0 : index
    %18 = vector.load %arg2[%c0_12, %c0_13] : memref<2x8xf32, #tpu.memory_space<vmem>>, vector<2x8xf32>
    %19 = vector.shape_cast %18 : vector<2x8xf32> to vector<2x8x1xf32>
    %20 = vector.broadcast %19 : vector<2x8x1xf32> to vector<2x8x128xf32>
    %21 = arith.mulf %17, %20 : vector<2x8x128xf32>
    %cst_14 = arith.constant dense<0.000000e+00> : vector<2x128xf32>
    %22 = vector.multi_reduction <add>, %21, %cst_14 [1] : vector<2x8x128xf32> to vector<2x128xf32>
    %23 = arith.truncf %22 : vector<2x128xf32> to vector<2x128xbf16>
    %c0_15 = arith.constant 0 : index
    %c0_16 = arith.constant 0 : index
    %24 = vector.load %arg7[%c0_15, %c0_16] : memref<128x128xbf16, #tpu.memory_space<vmem>>, vector<128x128xbf16>
    %cst_17 = arith.constant dense<0.000000e+00> : vector<2x128xf32>
    %25 = tpu.matmul %23, %24, %cst_17 {dimension_numbers = #tpu.dot_dimension_numbers<[1], [0], [0], [1], [0, 0, 1, 1], [], []>} : vector<2x128xbf16>, vector<128x128xbf16>, vector<2x128xf32> -> vector<2x128xf32>
    %c0_18 = arith.constant 0 : index
    %c0_19 = arith.constant 0 : index
    %26 = vector.load %arg8[%c0_18, %c0_19] : memref<1x128xf32, #tpu.memory_space<vmem>>, vector<1x128xf32>
    %27 = vector.broadcast %26 : vector<1x128xf32> to vector<2x128xf32>
    %28 = arith.addf %25, %27 : vector<2x128xf32>
    %cst_20 = arith.constant 0.000000e+00 : f32
    %29 = vector.broadcast %cst_20 : f32 to vector<2x128xf32>
    %30 = arith.maximumf %28, %29 : vector<2x128xf32>
    %31 = arith.truncf %30 : vector<2x128xf32> to vector<2x128xbf16>
    %c0_21 = arith.constant 0 : index
    %c0_22 = arith.constant 0 : index
    %32 = vector.load %arg9[%c0_21, %c0_22] : memref<128x128xbf16, #tpu.memory_space<vmem>>, vector<128x128xbf16>
    %cst_23 = arith.constant dense<0.000000e+00> : vector<2x128xf32>
    %33 = tpu.matmul %31, %32, %cst_23 {dimension_numbers = #tpu.dot_dimension_numbers<[1], [0], [0], [1], [0, 0, 1, 1], [], []>} : vector<2x128xbf16>, vector<128x128xbf16>, vector<2x128xf32> -> vector<2x128xf32>
    %c0_24 = arith.constant 0 : index
    %c0_25 = arith.constant 0 : index
    %34 = vector.load %arg10[%c0_24, %c0_25] : memref<1x128xf32, #tpu.memory_space<vmem>>, vector<1x128xf32>
    %35 = vector.broadcast %34 : vector<1x128xf32> to vector<2x128xf32>
    %36 = arith.addf %33, %35 : vector<2x128xf32>
    %37 = arith.mulf %36, %36 : vector<2x128xf32>
    %cst_26 = arith.constant dense<0.000000e+00> : vector<2xf32>
    %38 = vector.multi_reduction <add>, %37, %cst_26 [1] : vector<2x128xf32> to vector<2xf32>
    %39 = vector.shape_cast %38 : vector<2xf32> to vector<2x1xf32>
    %cst_27 = arith.constant 1.000000e-24 : f32
    %40 = vector.broadcast %cst_27 : f32 to vector<2x1xf32>
    %41 = arith.maximumf %39, %40 : vector<2x1xf32>
    %42 = math.rsqrt %41 : vector<2x1xf32>
    %43 = vector.broadcast %42 : vector<2x1xf32> to vector<2x128xf32>
    %44 = arith.mulf %36, %43 : vector<2x128xf32>
    %c0_28 = arith.constant 0 : index
    %c0_29 = arith.constant 0 : index
    %45 = vector.load %arg11[%c0_28, %c0_29] : memref<2x128xf32, #tpu.memory_space<vmem>>, vector<2x128xf32>
    tpu.vector_store %arg11[%c0_28, %c0_29], %44 {strides = array<i32>} : memref<2x128xf32, #tpu.memory_space<vmem>>, vector<2x128xf32>,
    return
  }
  func.func @transform_0(%arg0: i32) -> (i32, i32) {
    %c0_i32 = arith.constant 0 : i32
    %c0_i32_0 = arith.constant 0 : i32
    return %arg0, %c0_i32 : i32, i32
  }
  func.func @transform_1(%arg0: i32) -> (i32, i32) {
    %c0_i32 = arith.constant 0 : i32
    %c0_i32_0 = arith.constant 0 : i32
    return %arg0, %c0_i32 : i32, i32
  }
  func.func @transform_2(%arg0: i32) -> (i32, i32) {
    %c0_i32 = arith.constant 0 : i32
    %c0_i32_0 = arith.constant 0 : i32
    %c0_i32_1 = arith.constant 0 : i32
    return %c0_i32, %c0_i32_0 : i32, i32
  }
  func.func @transform_3(%arg0: i32) -> (i32, i32) {
    %c0_i32 = arith.constant 0 : i32
    %c0_i32_0 = arith.constant 0 : i32
    %c0_i32_1 = arith.constant 0 : i32
    return %c0_i32, %c0_i32_0 : i32, i32
  }
  func.func @transform_4(%arg0: i32) -> (i32, i32) {
    %c0_i32 = arith.constant 0 : i32
    %c0_i32_0 = arith.constant 0 : i32
    %c0_i32_1 = arith.constant 0 : i32
    return %c0_i32, %c0_i32_0 : i32, i32
  }
  func.func @transform_5(%arg0: i32) -> (i32, i32) {
    %c0_i32 = arith.constant 0 : i32
    %c0_i32_0 = arith.constant 0 : i32
    %c0_i32_1 = arith.constant 0 : i32
    return %c0_i32, %c0_i32_0 : i32, i32
  }
  func.func @transform_6(%arg0: i32) -> (i32, i32) {
    %c0_i32 = arith.constant 0 : i32
    %c0_i32_0 = arith.constant 0 : i32
    %c0_i32_1 = arith.constant 0 : i32
    return %c0_i32, %c0_i32_0 : i32, i32
  }
  func.func @transform_7(%arg0: i32) -> (i32, i32) {
    %c0_i32 = arith.constant 0 : i32
    %c0_i32_0 = arith.constant 0 : i32
    %c0_i32_1 = arith.constant 0 : i32
    return %c0_i32, %c0_i32_0 : i32, i32
  }
  func.func @transform_8(%arg0: i32) -> (i32, i32) {
    %c0_i32 = arith.constant 0 : i32
    %c0_i32_0 = arith.constant 0 : i32
    %c0_i32_1 = arith.constant 0 : i32
    return %c0_i32, %c0_i32_0 : i32, i32
  }
  func.func @transform_9(%arg0: i32) -> (i32, i32) {
    %c0_i32 = arith.constant 0 : i32
    %c0_i32_0 = arith.constant 0 : i32
    %c0_i32_1 = arith.constant 0 : i32
    return %c0_i32, %c0_i32_0 : i32, i32
  }
  func.func @transform_10(%arg0: i32) -> (i32, i32) {
    %c0_i32 = arith.constant 0 : i32
    %c0_i32_0 = arith.constant 0 : i32
    return %arg0, %c0_i32 : i32, i32
  }
}

</mosaic_0001>

<llo_original>
// kernel: general_encoder_forward.1
$region0: #{general_encoder_forward.1}
  #allocation0 [shape = 'u32[]', space=smem, size = 0x4, offset = 0x4, fixed_abs, tag = 'smem constant byte address 0x4 - core index']
  #allocation1 [shape = 'u32[144,128]{1,0:T(1,128)}', space=vmem, size = 0x12000, scoped, tag = 'internal scratch']
  %s0 = inlined_call_operand.hbm [shape: f32[16,32], index: 0, kind: input, shape index: {}]
  %s1 = inlined_call_operand.vmem [shape: f32[2,8], index: 1, kind: input, shape index: {}]
  %s2 = inlined_call_operand.hbm [shape: bf16[32,128], index: 2, kind: input, shape index: {}]
  %s3 = inlined_call_operand.vmem [shape: f32[1,128], index: 3, kind: input, shape index: {}]
  %s4 = inlined_call_operand.hbm [shape: bf16[128,128], index: 4, kind: input, shape index: {}]
  %s5 = inlined_call_operand.vmem [shape: f32[1,128], index: 5, kind: input, shape index: {}]
  %s6 = inlined_call_operand.hbm [shape: bf16[128,128], index: 6, kind: input, shape index: {}]
  %s7 = inlined_call_operand.vmem [shape: f32[1,128], index: 7, kind: input, shape index: {}]
  %s8 = inlined_call_operand.hbm [shape: bf16[128,128], index: 8, kind: input, shape index: {}]
  %s9 = inlined_call_operand.vmem [shape: f32[1,128], index: 9, kind: input, shape index: {}]
  %s10 = inlined_call_operand.hbm [shape: f32[2,128], index: 10, kind: output, shape index: {}]
  %s11 = sld [smem:[#allocation0]]
  $region70: #{general_encoder_forward.1} parent=0
    _
  %s13 = ssub.s32 1, %s11
  %s14 = scalar_select 0, %s13, %s11
  $region1: #{general_encoder_forward.1} parent=0
    #allocation2 [shape = 'u8[8192]{0}', space=vmem, size = 0x2000, scoped, tag = 'input window, operand 0, single buffered']
    #allocation3 [shape = 's32[1]{0}', space=sflag, size = 0x4, scoped, tag = 'scoped memory for general_encoder_forward.1']
    #allocation4 [shape = 's32[1]{0}', space=sflag, size = 0x4, scoped, tag = 'scoped memory for general_encoder_forward.1']
    #allocation5 [shape = 'u8[8192]{0}', space=vmem, size = 0x2000, scoped, tag = 'input window, operand 2, single buffered']
    #allocation6 [shape = 's32[1]{0}', space=sflag, size = 0x4, scoped, tag = 'scoped memory for general_encoder_forward.1']
    #allocation7 [shape = 'u8[32768]{0}', space=vmem, size = 0x8000, scoped, tag = 'input window, operand 4, single buffered']
    #allocation8 [shape = 'u8[32768]{0}', space=vmem, size = 0x8000, scoped, tag = 'input window, operand 6, single buffered']
    #allocation9 [shape = 's32[1]{0}', space=sflag, size = 0x4, scoped, tag = 'scoped memory for general_encoder_forward.1']
    #allocation10 [shape = 'u8[32768]{0}', space=vmem, size = 0x8000, scoped, tag = 'input window, operand 8, single buffered']
    #allocation11 [shape = 'u8[1024]{0}', space=vmem, size = 0x400, scoped, tag = 'output window, operand 0, single buffered']
    %15 = vsyncpa [#allocation3], 0
    %16 = vsyncpa [#allocation6], 0
    %17 = vsyncpa [#allocation9], 0
    %18 = vsyncpa [#allocation4], 0
    // Predicated region
    $region2: #{general_encoder_forward.1} parent=1 // pred_check
      _
    $region3: #{general_encoder_forward.1} parent=1 // pred_check_branch
      %20 = sbr.rel (0) target = $region5
    $region4: #{general_encoder_forward.1} parent=1 // pred_region
      %s22 = ssub.s32 256, 256
      %23 = vsyncadd [#allocation3], %s22
      %s24 = sshll.u32 [#allocation2], 4
      %s25 = int_to_ptr.vmem [resolvable:$true] %s24
      %30 = dma.hbm_to_vmem [thread:$0]  %s0, 256, %s25, [#allocation3], 128, 128, 8
    $region5: #{general_encoder_forward.1} parent=1 // pred_fallthru
      _
    // Predicated region
    $region6: #{general_encoder_forward.1} parent=1 // pred_check
      _
    $region7: #{general_encoder_forward.1} parent=1 // pred_check_branch
      %32 = sbr.rel (0) target = $region9
    $region8: #{general_encoder_forward.1} parent=1 // pred_region
      _
    $region9: #{general_encoder_forward.1} parent=1 // pred_fallthru
      _
    // Predicated region
    $region10: #{general_encoder_forward.1} parent=1 // pred_check
      _
    $region11: #{general_encoder_forward.1} parent=1 // pred_check_branch
      %34 = sbr.rel (0) target = $region13
    $region12: #{general_encoder_forward.1} parent=1 // pred_region
      %s36 = ssub.s32 256, 256
      %37 = vsyncadd [#allocation6], %s36
      %s38 = sshll.u32 [#allocation5], 4
      %s39 = int_to_ptr.vmem [resolvable:$true] %s38
      %44 = dma.hbm_to_vmem [thread:$0]  %s2, 256, %s39, [#allocation6], 64, 64, 4
    $region13: #{general_encoder_forward.1} parent=1 // pred_fallthru
      _
    // Predicated region
    $region14: #{general_encoder_forward.1} parent=1 // pred_check
      _
    $region15: #{general_encoder_forward.1} parent=1 // pred_check_branch
      %46 = sbr.rel (0) target = $region17
    $region16: #{general_encoder_forward.1} parent=1 // pred_region
      _
    $region17: #{general_encoder_forward.1} parent=1 // pred_fallthru
      _
    // Predicated region
    $region18: #{general_encoder_forward.1} parent=1 // pred_check
      _
    $region19: #{general_encoder_forward.1} parent=1 // pred_check_branch
      %48 = sbr.rel (0) target = $region21
    $region20: #{general_encoder_forward.1} parent=1 // pred_region
      %s50 = ssub.s32 1024, 1024
      %51 = vsyncadd [#allocation6], %s50
      %s52 = sshll.u32 [#allocation7], 4
      %s53 = int_to_ptr.vmem [resolvable:$true] %s52
      %58 = dma.hbm_to_vmem [thread:$0]  %s4, 1024, %s53, [#allocation6], 64, 64, 4
    $region21: #{general_encoder_forward.1} parent=1 // pred_fallthru
      _
    // Predicated region
    $region22: #{general_encoder_forward.1} parent=1 // pred_check
      _
    $region23: #{general_encoder_forward.1} parent=1 // pred_check_branch
      %60 = sbr.rel (0) target = $region25
    $region24: #{general_encoder_forward.1} parent=1 // pred_region
      _
    $region25: #{general_encoder_forward.1} parent=1 // pred_fallthru
      _
    // Predicated region
    $region26: #{general_encoder_forward.1} parent=1 // pred_check
      _
    $region27: #{general_encoder_forward.1} parent=1 // pred_check_branch
      %62 = sbr.rel (0) target = $region29
    $region28: #{general_encoder_forward.1} parent=1 // pred_region
      %s64 = ssub.s32 1024, 1024
      %65 = vsyncadd [#allocation9], %s64
      %s66 = sshll.u32 [#allocation8], 4
      %s67 = int_to_ptr.vmem [resolvable:$true] %s66
      %72 = dma.hbm_to_vmem [thread:$0]  %s6, 1024, %s67, [#allocation9], 64, 64, 4
    $region29: #{general_encoder_forward.1} parent=1 // pred_fallthru
      _
    // Predicated region
    $region30: #{general_encoder_forward.1} parent=1 // pred_check
      _
    $region31: #{general_encoder_forward.1} parent=1 // pred_check_branch
      %74 = sbr.rel (0) target = $region33
    $region32: #{general_encoder_forward.1} parent=1 // pred_region
      _
    $region33: #{general_encoder_forward.1} parent=1 // pred_fallthru
      _
    // Predicated region
    $region34: #{general_encoder_forward.1} parent=1 // pred_check
      _
    $region35: #{general_encoder_forward.1} parent=1 // pred_check_branch
      %76 = sbr.rel (0) target = $region37
    $region36: #{general_encoder_forward.1} parent=1 // pred_region
      %s78 = ssub.s32 1024, 1024
      %79 = vsyncadd [#allocation9], %s78
      %s80 = sshll.u32 [#allocation10], 4
      %s81 = int_to_ptr.vmem [resolvable:$true] %s80
      %86 = dma.hbm_to_vmem [thread:$0]  %s8, 1024, %s81, [#allocation9], 64, 64, 4
    $region37: #{general_encoder_forward.1} parent=1 // pred_fallthru
      _
    // Predicated region
    $region38: #{general_encoder_forward.1} parent=1 // pred_check
      _
    $region39: #{general_encoder_forward.1} parent=1 // pred_check_branch
      %88 = sbr.rel (0) target = $region41
    $region40: #{general_encoder_forward.1} parent=1 // pred_region
      _
    $region41: #{general_encoder_forward.1} parent=1 // pred_fallthru
      _
    // Predicated region
    $region42: #{general_encoder_forward.1} parent=1 // pred_check
      _
    $region43: #{general_encoder_forward.1} parent=1 // pred_check_branch
      %90 = sbr.rel (0) target = $region45
    $region44: #{general_encoder_forward.1} parent=1 // pred_region
      %91 = dma.done [#allocation3], 256
    $region45: #{general_encoder_forward.1} parent=1 // pred_fallthru
      _
    // Predicated region
    $region46: #{general_encoder_forward.1} parent=1 // pred_check
      _
    $region47: #{general_encoder_forward.1} parent=1 // pred_check_branch
      %93 = sbr.rel (0) target = $region49
    $region48: #{general_encoder_forward.1} parent=1 // pred_region
      %94 = dma.done [#allocation6], 256
    $region49: #{general_encoder_forward.1} parent=1 // pred_fallthru
      _
    // Predicated region
    $region50: #{general_encoder_forward.1} parent=1 // pred_check
      _
    $region51: #{general_encoder_forward.1} parent=1 // pred_check_branch
      %96 = sbr.rel (0) target = $region53
    $region52: #{general_encoder_forward.1} parent=1 // pred_region
      %97 = dma.done [#allocation6], 1024
    $region53: #{general_encoder_forward.1} parent=1 // pred_fallthru
      _
    // Predicated region
    $region54: #{general_encoder_forward.1} parent=1 // pred_check
      _
    $region55: #{general_encoder_forward.1} parent=1 // pred_check_branch
      %99 = sbr.rel (0) target = $region57
    $region56: #{general_encoder_forward.1} parent=1 // pred_region
      %100 = dma.done [#allocation9], 1024
    $region57: #{general_encoder_forward.1} parent=1 // pred_fallthru
      _
    // Predicated region
    $region58: #{general_encoder_forward.1} parent=1 // pred_check
      _
    $region59: #{general_encoder_forward.1} parent=1 // pred_check_branch
      %102 = sbr.rel (0) target = $region61
    $region60: #{general_encoder_forward.1} parent=1 // pred_region
      %103 = dma.done [#allocation9], 1024
    $region61: #{general_encoder_forward.1} parent=1 // pred_fallthru
      _
    %v105 = vld [vmem:[#allocation2] sm:$0xff]
    %v106 = vld [vmem:[#allocation2 + $0x8] sm:$0xff]
    %v107 = vpack.c.bf16 %v106, %v105
    %v108 = vld [vmem:[#allocation5] sm:$0xf]
    %v109 = vld [vmem:[#allocation5 + $0x4] sm:$0xf]
    %v110 = vld [vmem:[#allocation5 + $0x8] sm:$0xf]
    %v111 = vld [vmem:[#allocation5 + $0xc] sm:$0xf]
    %v112 = vld [vmem:[%s3] sm:$0x1]
    %v114 = vlaneseq
    %v115 = vshrl.u32 %v114, 7
    %v116 = vsub.s32 0, %v115
    %v117 = vrot.slane %v112, %v116
    %v123 = vunpack.c.l.b16 %v108
    %v124 = vunpack.c.l.b16 %v109
    %v125 = vunpack.c.l.b16 %v110
    %v126 = vunpack.c.l.b16 %v111
    %v127 = vpack.c.b16 %v124, %v123
    %v128 = vpack.c.b16 %v126, %v125
    %vm131 = vcmask 261120
    %v133 = vsel %vm131, %v107, 0
    %135 = vmatprep.subr.bf16.mxu0 0
    %136 = vmatpush1.bf16.msra.mxu0 %v127
    %137 = vmatprep.subr.bf16.mxu0 0
    %138 = vmatpush1.bf16.msra.mxu0 %v128
    %139 = vmatprep.subr.bf16.mxu0 0
    %140 = vmatpush1.bf16.msra.mxu0 0
    %141 = vmatprep.subr.bf16.mxu0 0
    %142 = vmatpush1.bf16.msra.mxu0 0
    %143 = vmatprep.subr.bf16.mxu0 0
    %144 = vmatpush1.bf16.msra.mxu0 0
    %145 = vmatprep.subr.bf16.mxu0 0
    %146 = vmatpush1.bf16.msra.mxu0 0
    %147 = vmatprep.subr.bf16.mxu0 0
    %148 = vmatpush1.bf16.msra.mxu0 0
    %149 = vmatprep.subr.bf16.mxu0 0
    %150 = vmatpush1.bf16.msra.mxu0 0
    %151 = vmatprep.subr.bf16.mxu0 0
    %152 = vmatpush1.bf16.msra.mxu0 0
    %153 = vmatprep.subr.bf16.mxu0 0
    %154 = vmatpush1.bf16.msra.mxu0 0
    %155 = vmatprep.subr.bf16.mxu0 0
    %156 = vmatpush1.bf16.msra.mxu0 0
    %157 = vmatprep.subr.bf16.mxu0 0
    %158 = vmatpush1.bf16.msra.mxu0 0
    %159 = vmatprep.subr.bf16.mxu0 0
    %160 = vmatpush1.bf16.msra.mxu0 0
    %161 = vmatprep.subr.bf16.mxu0 0
    %162 = vmatpush1.bf16.msra.mxu0 0
    %163 = vmatprep.subr.bf16.mxu0 0
    %164 = vmatpush1.bf16.msra.mxu0 0
    %165 = vmatprep.subr.bf16.mxu0 0
    %166 = vmatpush1.bf16.msra.mxu0 0
    %167 = vmatprep.mubr.bf16.mxu0 0
    %168 = vmatmul.mubr.bf16.gmra.mrb[0].mxu0 %v133
    %v169 = vpop.f32.mrb[0].mxu0
    %v170 = vadd.f32 %v117, %v169
    %v171 = vpop.f32.mrb[0].mxu0
    %v172 = vpop.f32.mrb[0].mxu0
    %v173 = vadd.f32 %v117, %v172
    %v174 = vpop.f32.mrb[0].mxu0
    %175 = vdwg.mxu0
    %v176 = vmax.f32 %v170, 0.0
    %v177 = vmax.f32 %v173, 0.0
    %v178 = vpack.c.bf16 %v177, %v176
    %v179 = vld [vmem:[#allocation7] sm:$0xf]
    %v180 = vld [vmem:[#allocation7 + $0x4] sm:$0xf]
    %v181 = vld [vmem:[#allocation7 + $0x8] sm:$0xf]
    %v182 = vld [vmem:[#allocation7 + $0xc] sm:$0xf]
    %v183 = vld [vmem:[#allocation7 + $0x10] sm:$0xf]
    %v184 = vld [vmem:[#allocation7 + $0x14] sm:$0xf]
    %v185 = vld [vmem:[#allocation7 + $0x18] sm:$0xf]
    %v186 = vld [vmem:[#allocation7 + $0x1c] sm:$0xf]
    %v187 = vld [vmem:[#allocation7 + $0x20] sm:$0xf]
    %v188 = vld [vmem:[#allocation7 + $0x24] sm:$0xf]
    %v189 = vld [vmem:[#allocation7 + $0x28] sm:$0xf]
    %v190 = vld [vmem:[#allocation7 + $0x2c] sm:$0xf]
    %v191 = vld [vmem:[#allocation7 + $0x30] sm:$0xf]
    %v192 = vld [vmem:[#allocation7 + $0x34] sm:$0xf]
    %v193 = vld [vmem:[#allocation7 + $0x38] sm:$0xf]
    %v194 = vld [vmem:[#allocation7 + $0x3c] sm:$0xf]
    %v195 = vld [vmem:[%s5] sm:$0x1]
    %v197 = vlaneseq
    %v198 = vshrl.u32 %v197, 7
    %v199 = vsub.s32 0, %v198
    %v200 = vrot.slane %v195, %v199
    %v218 = vunpack.c.l.b16 %v179
    %v219 = vunpack.c.l.b16 %v180
    %v220 = vunpack.c.l.b16 %v181
    %v221 = vunpack.c.l.b16 %v182
    %v222 = vunpack.c.l.b16 %v183
    %v223 = vunpack.c.l.b16 %v184
    %v224 = vunpack.c.l.b16 %v185
    %v225 = vunpack.c.l.b16 %v186
    %v226 = vunpack.c.l.b16 %v187
    %v227 = vunpack.c.l.b16 %v188
    %v228 = vunpack.c.l.b16 %v189
    %v229 = vunpack.c.l.b16 %v190
    %v230 = vunpack.c.l.b16 %v191
    %v231 = vunpack.c.l.b16 %v192
    %v232 = vunpack.c.l.b16 %v193
    %v233 = vunpack.c.l.b16 %v194
    %v234 = vpack.c.b16 %v219, %v218
    %v235 = vpack.c.b16 %v221, %v220
    %v236 = vpack.c.b16 %v223, %v222
    %v237 = vpack.c.b16 %v225, %v224
    %v238 = vpack.c.b16 %v227, %v226
    %v239 = vpack.c.b16 %v229, %v228
    %v240 = vpack.c.b16 %v231, %v230
    %v241 = vpack.c.b16 %v233, %v232
    %250 = vmatprep.subr.bf16.mxu0 0
    %251 = vmatpush1.bf16.msra.mxu0 %v234
    %252 = vmatprep.subr.bf16.mxu0 0
    %253 = vmatpush1.bf16.msra.mxu0 %v235
    %254 = vmatprep.subr.bf16.mxu0 0
    %255 = vmatpush1.bf16.msra.mxu0 %v236
    %256 = vmatprep.subr.bf16.mxu0 0
    %257 = vmatpush1.bf16.msra.mxu0 %v237
    %258 = vmatprep.subr.bf16.mxu0 0
    %259 = vmatpush1.bf16.msra.mxu0 %v238
    %260 = vmatprep.subr.bf16.mxu0 0
    %261 = vmatpush1.bf16.msra.mxu0 %v239
    %262 = vmatprep.subr.bf16.mxu0 0
    %263 = vmatpush1.bf16.msra.mxu0 %v240
    %264 = vmatprep.subr.bf16.mxu0 0
    %265 = vmatpush1.bf16.msra.mxu0 %v241
    %266 = vmatprep.subr.bf16.mxu0 0
    %267 = vmatpush1.bf16.msra.mxu0 0
    %268 = vmatprep.subr.bf16.mxu0 0
    %269 = vmatpush1.bf16.msra.mxu0 0
    %270 = vmatprep.subr.bf16.mxu0 0
    %271 = vmatpush1.bf16.msra.mxu0 0
    %272 = vmatprep.subr.bf16.mxu0 0
    %273 = vmatpush1.bf16.msra.mxu0 0
    %274 = vmatprep.subr.bf16.mxu0 0
    %275 = vmatpush1.bf16.msra.mxu0 0
    %276 = vmatprep.subr.bf16.mxu0 0
    %277 = vmatpush1.bf16.msra.mxu0 0
    %278 = vmatprep.subr.bf16.mxu0 0
    %279 = vmatpush1.bf16.msra.mxu0 0
    %280 = vmatprep.subr.bf16.mxu0 0
    %281 = vmatpush1.bf16.msra.mxu0 0
    %282 = vmatprep.mubr.bf16.mxu0 0
    %283 = vmatmul.mubr.bf16.gmra.mrb[0].mxu0 %v178
    %v284 = vpop.f32.mrb[0].mxu0
    %v285 = vadd.f32 %v200, %v284
    %v286 = vpop.f32.mrb[0].mxu0
    %v287 = vpop.f32.mrb[0].mxu0
    %v288 = vadd.f32 %v200, %v287
    %v289 = vpop.f32.mrb[0].mxu0
    %290 = vdwg.mxu0
    %v291 = vmax.f32 %v285, 0.0
    %v292 = vmax.f32 %v288, 0.0
    %v293 = vld [vmem:[%s1] sm:$0x3]
    %v294 = vlaneseq
    %v295 = vshrl.u32 %v294, 7
    %v296 = vsub.s32 0, %v295
    %v297 = vrot.slane %v293, %v296
    %299 = vbcast.lane.b32.xlu0 %v297, 256
    %v300 = vpop.permute.xlu0 %299
    %v301 = vlaneseq
    %v302 = vshrl.u32 %v301, 7
    %v303 = vsub.s32 1, %v302
    %v304 = vrot.slane %v293, %v303
    %306 = vbcast.lane.b32.xlu0 %v304, 256
    %v307 = vpop.permute.xlu0 %306
    %v308 = vmul.f32 %v291, %v300
    %v309 = vmul.f32 %v292, %v307
    %v310 = vrot.slane %v308, 4
    %v311 = vadd.f32 %v308, %v310
    %v312 = vrot.slane %v311, 2
    %v313 = vadd.f32 %v311, %v312
    %v314 = vrot.slane %v313, 1
    %v315 = vadd.f32 %v313, %v314
    %v316 = vrot.slane %v309, 4
    %v317 = vadd.f32 %v309, %v316
    %v318 = vrot.slane %v317, 2
    %v319 = vadd.f32 %v317, %v318
    %v320 = vrot.slane %v319, 1
    %v321 = vadd.f32 %v319, %v320
    %v322 = vpack.c.bf16 %v315, %v315
    %v323 = vpack.c.bf16 %v321, %v321
    %v324 = vld [vmem:[#allocation8] sm:$0xf]
    %v325 = vld [vmem:[#allocation8 + $0x4] sm:$0xf]
    %v326 = vld [vmem:[#allocation8 + $0x8] sm:$0xf]
    %v327 = vld [vmem:[#allocation8 + $0xc] sm:$0xf]
    %v328 = vld [vmem:[#allocation8 + $0x10] sm:$0xf]
    %v329 = vld [vmem:[#allocation8 + $0x14] sm:$0xf]
    %v330 = vld [vmem:[#allocation8 + $0x18] sm:$0xf]
    %v331 = vld [vmem:[#allocation8 + $0x1c] sm:$0xf]
    %v332 = vld [vmem:[#allocation8 + $0x20] sm:$0xf]
    %v333 = vld [vmem:[#allocation8 + $0x24] sm:$0xf]
    %v334 = vld [vmem:[#allocation8 + $0x28] sm:$0xf]
    %v335 = vld [vmem:[#allocation8 + $0x2c] sm:$0xf]
    %v336 = vld [vmem:[#allocation8 + $0x30] sm:$0xf]
    %v337 = vld [vmem:[#allocation8 + $0x34] sm:$0xf]
    %v338 = vld [vmem:[#allocation8 + $0x38] sm:$0xf]
    %v339 = vld [vmem:[#allocation8 + $0x3c] sm:$0xf]
    %v340 = vld [vmem:[%s7] sm:$0x1]
    %v342 = vlaneseq
    %v343 = vshrl.u32 %v342, 7
    %v344 = vsub.s32 0, %v343
    %v345 = vrot.slane %v340, %v344
    %v349 = vunpack.c.l.b16 %v322
    %v350 = vunpack.c.l.b16 %v323
    %vm351 = vcmask 1041409
    %v352 = vsel %vm351, %v350, %v349
    %v353 = vpack.c.b16 %v352, %v352
    %v371 = vunpack.c.l.b16 %v324
    %v372 = vunpack.c.l.b16 %v325
    %v373 = vunpack.c.l.b16 %v326
    %v374 = vunpack.c.l.b16 %v327
    %v375 = vunpack.c.l.b16 %v328
    %v376 = vunpack.c.l.b16 %v329
    %v377 = vunpack.c.l.b16 %v330
    %v378 = vunpack.c.l.b16 %v331
    %v379 = vunpack.c.l.b16 %v332
    %v380 = vunpack.c.l.b16 %v333
    %v381 = vunpack.c.l.b16 %v334
    %v382 = vunpack.c.l.b16 %v335
    %v383 = vunpack.c.l.b16 %v336
    %v384 = vunpack.c.l.b16 %v337
    %v385 = vunpack.c.l.b16 %v338
    %v386 = vunpack.c.l.b16 %v339
    %v387 = vpack.c.b16 %v372, %v371
    %v388 = vpack.c.b16 %v374, %v373
    %v389 = vpack.c.b16 %v376, %v375
    %v390 = vpack.c.b16 %v378, %v377
    %v391 = vpack.c.b16 %v380, %v379
    %v392 = vpack.c.b16 %v382, %v381
    %v393 = vpack.c.b16 %v384, %v383
    %v394 = vpack.c.b16 %v386, %v385
    %403 = vmatprep.subr.bf16.mxu0 0
    %404 = vmatpush1.bf16.msra.mxu0 %v387
    %405 = vmatprep.subr.bf16.mxu0 0
    %406 = vmatpush1.bf16.msra.mxu0 %v388
    %407 = vmatprep.subr.bf16.mxu0 0
    %408 = vmatpush1.bf16.msra.mxu0 %v389
    %409 = vmatprep.subr.bf16.mxu0 0
    %410 = vmatpush1.bf16.msra.mxu0 %v390
    %411 = vmatprep.subr.bf16.mxu0 0
    %412 = vmatpush1.bf16.msra.mxu0 %v391
    %413 = vmatprep.subr.bf16.mxu0 0
    %414 = vmatpush1.bf16.msra.mxu0 %v392
    %415 = vmatprep.subr.bf16.mxu0 0
    %416 = vmatpush1.bf16.msra.mxu0 %v393
    %417 = vmatprep.subr.bf16.mxu0 0
    %418 = vmatpush1.bf16.msra.mxu0 %v394
    %419 = vmatprep.subr.bf16.mxu0 0
    %420 = vmatpush1.bf16.msra.mxu0 0
    %421 = vmatprep.subr.bf16.mxu0 0
    %422 = vmatpush1.bf16.msra.mxu0 0
    %423 = vmatprep.subr.bf16.mxu0 0
    %424 = vmatpush1.bf16.msra.mxu0 0
    %425 = vmatprep.subr.bf16.mxu0 0
    %426 = vmatpush1.bf16.msra.mxu0 0
    %427 = vmatprep.subr.bf16.mxu0 0
    %428 = vmatpush1.bf16.msra.mxu0 0
    %429 = vmatprep.subr.bf16.mxu0 0
    %430 = vmatpush1.bf16.msra.mxu0 0
    %431 = vmatprep.subr.bf16.mxu0 0
    %432 = vmatpush1.bf16.msra.mxu0 0
    %433 = vmatprep.subr.bf16.mxu0 0
    %434 = vmatpush1.bf16.msra.mxu0 0
    %435 = vmatprep.mubr.bf16.mxu0 0
    %436 = vmatmul.mubr.bf16.gmra.mrb[0].mxu0 %v353
    %v437 = vpop.f32.mrb[0].mxu0
    %v438 = vadd.f32 %v345, %v437
    %v439 = vpop.f32.mrb[0].mxu0
    %v440 = vpop.f32.mrb[0].mxu0
    %v441 = vpop.f32.mrb[0].mxu0
    %442 = vdwg.mxu0
    %v443 = vmax.f32 %v438, 0.0
    %v444 = vpack.c.bf16 %v443, %v443
    %v445 = vld [vmem:[#allocation10] sm:$0xf]
    %v446 = vld [vmem:[#allocation10 + $0x4] sm:$0xf]
    %v447 = vld [vmem:[#allocation10 + $0x8] sm:$0xf]
    %v448 = vld [vmem:[#allocation10 + $0xc] sm:$0xf]
    %v449 = vld [vmem:[#allocation10 + $0x10] sm:$0xf]
    %v450 = vld [vmem:[#allocation10 + $0x14] sm:$0xf]
    %v451 = vld [vmem:[#allocation10 + $0x18] sm:$0xf]
    %v452 = vld [vmem:[#allocation10 + $0x1c] sm:$0xf]
    %v453 = vld [vmem:[#allocation10 + $0x20] sm:$0xf]
    %v454 = vld [vmem:[#allocation10 + $0x24] sm:$0xf]
    %v455 = vld [vmem:[#allocation10 + $0x28] sm:$0xf]
    %v456 = vld [vmem:[#allocation10 + $0x2c] sm:$0xf]
    %v457 = vld [vmem:[#allocation10 + $0x30] sm:$0xf]
    %v458 = vld [vmem:[#allocation10 + $0x34] sm:$0xf]
    %v459 = vld [vmem:[#allocation10 + $0x38] sm:$0xf]
    %v460 = vld [vmem:[#allocation10 + $0x3c] sm:$0xf]
    %v461 = vld [vmem:[%s9] sm:$0x1]
    %v463 = vlaneseq
    %v464 = vshrl.u32 %v463, 7
    %v465 = vsub.s32 0, %v464
    %v466 = vrot.slane %v461, %v465
    %v484 = vunpack.c.l.b16 %v445
    %v485 = vunpack.c.l.b16 %v446
    %v486 = vunpack.c.l.b16 %v447
    %v487 = vunpack.c.l.b16 %v448
    %v488 = vunpack.c.l.b16 %v449
    %v489 = vunpack.c.l.b16 %v450
    %v490 = vunpack.c.l.b16 %v451
    %v491 = vunpack.c.l.b16 %v452
    %v492 = vunpack.c.l.b16 %v453
    %v493 = vunpack.c.l.b16 %v454
    %v494 = vunpack.c.l.b16 %v455
    %v495 = vunpack.c.l.b16 %v456
    %v496 = vunpack.c.l.b16 %v457
    %v497 = vunpack.c.l.b16 %v458
    %v498 = vunpack.c.l.b16 %v459
    %v499 = vunpack.c.l.b16 %v460
    %v500 = vpack.c.b16 %v485, %v484
    %v501 = vpack.c.b16 %v487, %v486
    %v502 = vpack.c.b16 %v489, %v488
    %v503 = vpack.c.b16 %v491, %v490
    %v504 = vpack.c.b16 %v493, %v492
    %v505 = vpack.c.b16 %v495, %v494
    %v506 = vpack.c.b16 %v497, %v496
    %v507 = vpack.c.b16 %v499, %v498
    %516 = vmatprep.subr.bf16.mxu0 0
    %517 = vmatpush1.bf16.msra.mxu0 %v500
    %518 = vmatprep.subr.bf16.mxu0 0
    %519 = vmatpush1.bf16.msra.mxu0 %v501
    %520 = vmatprep.subr.bf16.mxu0 0
    %521 = vmatpush1.bf16.msra.mxu0 %v502
    %522 = vmatprep.subr.bf16.mxu0 0
    %523 = vmatpush1.bf16.msra.mxu0 %v503
    %524 = vmatprep.subr.bf16.mxu0 0
    %525 = vmatpush1.bf16.msra.mxu0 %v504
    %526 = vmatprep.subr.bf16.mxu0 0
    %527 = vmatpush1.bf16.msra.mxu0 %v505
    %528 = vmatprep.subr.bf16.mxu0 0
    %529 = vmatpush1.bf16.msra.mxu0 %v506
    %530 = vmatprep.subr.bf16.mxu0 0
    %531 = vmatpush1.bf16.msra.mxu0 %v507
    %532 = vmatprep.subr.bf16.mxu0 0
    %533 = vmatpush1.bf16.msra.mxu0 0
    %534 = vmatprep.subr.bf16.mxu0 0
    %535 = vmatpush1.bf16.msra.mxu0 0
    %536 = vmatprep.subr.bf16.mxu0 0
    %537 = vmatpush1.bf16.msra.mxu0 0
    %538 = vmatprep.subr.bf16.mxu0 0
    %539 = vmatpush1.bf16.msra.mxu0 0
    %540 = vmatprep.subr.bf16.mxu0 0
    %541 = vmatpush1.bf16.msra.mxu0 0
    %542 = vmatprep.subr.bf16.mxu0 0
    %543 = vmatpush1.bf16.msra.mxu0 0
    %544 = vmatprep.subr.bf16.mxu0 0
    %545 = vmatpush1.bf16.msra.mxu0 0
    %546 = vmatprep.subr.bf16.mxu0 0
    %547 = vmatpush1.bf16.msra.mxu0 0
    %548 = vmatprep.mubr.bf16.mxu0 0
    %549 = vmatmul.mubr.bf16.gmra.mrb[0].mxu0 %v444
    %v550 = vpop.f32.mrb[0].mxu0
    %v551 = vadd.f32 %v466, %v550
    %v552 = vpop.f32.mrb[0].mxu0
    %v553 = vpop.f32.mrb[0].mxu0
    %v554 = vpop.f32.mrb[0].mxu0
    %555 = vdwg.mxu0
    %v556 = vmul.f32 %v551, %v551
    %vm557 = vcmask 1041408
    %v558 = vsel %vm557, %v556, 0.0
    %559 = vadd.xlane.f32.xlu0 %v558
    %v560 = vpop.xlane.xlu0 %559
    %v561 = vmax.f32 %v560, 1e-24
    %v562 = vrsqrt.pop %v561
    %v563 = vmul.f32 %v551, %v562
    %564 = vst [vmem:[#allocation11] sm:$0x3] %v563
    // Predicated region
    $region62: #{general_encoder_forward.1} parent=1 // pred_check
      _
    $region63: #{general_encoder_forward.1} parent=1 // pred_check_branch
      %566 = sbr.rel (0) target = $region65
    $region64: #{general_encoder_forward.1} parent=1 // pred_region
      %s568 = ssub.s32 32, 32
      %569 = vsyncadd [#allocation4], %s568
      %s571 = sshll.u32 [#allocation11], 4
      %s572 = int_to_ptr.vmem [resolvable:$true] %s571
      %574 = dma.vmem_to_hbm [thread:$0]  %s572, 32, %s10, [#allocation4]
    $region65: #{general_encoder_forward.1} parent=1 // pred_fallthru
      _
    // Predicated region
    $region66: #{general_encoder_forward.1} parent=1 // pred_check
      _
    $region67: #{general_encoder_forward.1} parent=1 // pred_check_branch
      %576 = sbr.rel (0) target = $region69
    $region68: #{general_encoder_forward.1} parent=1 // pred_region
      %577 = dma.done [#allocation4], 32
    $region69: #{general_encoder_forward.1} parent=1 // pred_fallthru
      _
    %578 = vsyncpa [#allocation3], 1
    %579 = vsyncpa [#allocation6], 1
    %580 = vsyncpa [#allocation9], 1
    %581 = vsyncpa [#allocation4], 1

</llo_original>
